<compile_context>
chip_gen: v7x
topology: tpu7x:2x2x1
jax: 0.10.0
libtpu: 0.0.40
codegen_flags: <defaults>
</compile_context>

<pallas_src>
import jax
import jax.numpy as jnp
from jax.experimental import pallas as pl
from jax.experimental.pallas import tpu as pltpu


def _linear2_kernel(x_ref, w_ref, b_ref, o_ref):
    # x_ref: (TB, D)  VMEM   streamed batch tile
    # w_ref: (2, D)   VMEM   resident PyTorch-layout weight
    # b_ref: (2,)     SMEM   bias scalars
    # o_ref: (TB, 2)  VMEM   logits
    x = x_ref[...]                                   # (TB, D) f32
    w = w_ref[...]                                   # (2, D)  f32
    # Two GEMV-like logits on the VPU (mul) + XLU (lane reduce); MXU untouched.
    l0 = jnp.sum(x * w[0:1, :], axis=-1, keepdims=True) + b_ref[0]   # (TB, 1)
    l1 = jnp.sum(x * w[1:2, :], axis=-1, keepdims=True) + b_ref[1]   # (TB, 1)
    o_ref[...] = jnp.concatenate([l0, l1], axis=-1).astype(o_ref.dtype)


def _round_up(n: int, m: int) -> int:
    return ((n + m - 1) // m) * m


def fake_news_classifier_forward(x, weight, bias):
    """y = x @ weight.T + bias, matching nn.Linear(input_dim, 2).

    x:      (B, D) float32
    weight: (2, D) float32   (PyTorch Linear layout, used as-is)
    bias:   (2,)   float32
    returns (B, 2) float32
    """
    B, D = x.shape
    out_dim = weight.shape[0]

    # Batch tile size: multiple of 8, capped at 2048 rows and by a VMEM budget
    # (2 double-buffered x tiles must fit comfortably under the scoped limit on
    # every TPU generation, including v7x's 64 MiB physical VMEM).
    vmem_budget_bytes = 24 * 1024 * 1024
    row_bytes = D * 4  # f32
    max_tb_by_vmem = max(8, (vmem_budget_bytes // (2 * row_bytes)) // 8 * 8)
    TB = max(8, min(2048, max_tb_by_vmem, _round_up(B, 8)))

    grid = (pl.cdiv(B, TB),)

    return pl.pallas_call(
        _linear2_kernel,
        out_shape=jax.ShapeDtypeStruct((B, out_dim), jnp.float32),
        grid=grid,
        in_specs=[
            # Streamed batch tiles of x.
            pl.BlockSpec((TB, D), lambda i: (i, 0)),
            # Full weight, resident across all grid steps (no re-DMA).
            pl.BlockSpec((out_dim, D), lambda i: (0, 0)),
            # Bias as SMEM scalars.
            pl.BlockSpec(memory_space=pltpu.MemorySpace.SMEM),
        ],
        out_specs=pl.BlockSpec((TB, out_dim), lambda i: (i, 0)),
        compiler_params=pltpu.CompilerParams(
            dimension_semantics=("parallel",),      # megacore-shardable on v7x
            vmem_limit_bytes=32 * 1024 * 1024,
        ),
    )(x, weight, bias)


if __name__ == "__main__":
    # Small shapes consistent with the module: batch=8, input_dim=32.
    B, D, OUT = 8, 32, 2

    key = jax.random.PRNGKey(0)
    kx, kw, kb = jax.random.split(key, 3)

    x = jax.random.normal(kx, (B, D), dtype=jnp.float32)
    bound = 1.0 / (D ** 0.5)
    weight = jax.random.uniform(kw, (OUT, D), dtype=jnp.float32,
                                minval=-bound, maxval=bound)
    bias = jax.random.uniform(kb, (OUT,), dtype=jnp.float32,
                              minval=-bound, maxval=bound)

    y = fake_news_classifier_forward(x, weight, bias)
    y = jax.block_until_ready(y)

    # Reference check against plain JAX.
    y_ref = x @ weight.T + bias
    assert y.shape == (B, OUT)
    assert jnp.allclose(y, y_ref, atol=1e-5, rtol=1e-5)

    print("KERNEL_OK")
</pallas_src>

<mosaic_0001>
module attributes {stable_mosaic.version = 11 : i64} {
  func.func @_linear2_kernel(%arg0: i32, %arg1: memref<8x32xf32, #tpu.memory_space<vmem>>, %arg2: memref<2x32xf32, #tpu.memory_space<vmem>>, %arg3: memref<2xf32, #tpu.memory_space<smem>>, %arg4: memref<8x2xf32, #tpu.memory_space<vmem>>) attributes {dimension_semantics = [#tpu.dimension_semantics<parallel>], iteration_bounds = array<i64: 1>, scalar_prefetch = 0 : i64, scratch_operands = 0 : i64, tpu.core_type = #tpu.core_type<tc>, window_params = [{transform_indices = @transform_0, window_bounds = array<i64: 8, 32>}, {pipeline_mode = #tpu.pipeline_mode<synchronous>, transform_indices = @transform_1, window_bounds = array<i64: 2, 32>}, {transform_indices = @transform_2, window_bounds = array<i64: 2>}, {transform_indices = @transform_3, window_bounds = array<i64: 8, 2>}]} {
    %c0 = arith.constant 0 : index
    %c0_0 = arith.constant 0 : index
    %0 = vector.load %arg1[%c0, %c0_0] : memref<8x32xf32, #tpu.memory_space<vmem>>, vector<8x32xf32>
    %c0_1 = arith.constant 0 : index
    %c0_2 = arith.constant 0 : index
    %1 = vector.load %arg2[%c0_1, %c0_2] : memref<2x32xf32, #tpu.memory_space<vmem>>, vector<2x32xf32>
    %2 = vector.extract_strided_slice %1 {offsets = [0, 0], sizes = [1, 32], strides = [1, 1]} : vector<2x32xf32> to vector<1x32xf32>
    %3 = vector.broadcast %2 : vector<1x32xf32> to vector<8x32xf32>
    %4 = arith.mulf %0, %3 : vector<8x32xf32>
    %cst = arith.constant dense<0.000000e+00> : vector<8xf32>
    %5 = vector.multi_reduction <add>, %4, %cst [1] : vector<8x32xf32> to vector<8xf32>
    %6 = vector.shape_cast %5 : vector<8xf32> to vector<8x1xf32>
    %c0_3 = arith.constant 0 : index
    %7 = memref.load %arg3[%c0_3] : memref<2xf32, #tpu.memory_space<smem>>
    %8 = vector.broadcast %7 : f32 to vector<8x1xf32>
    %9 = arith.addf %6, %8 : vector<8x1xf32>
    %10 = vector.extract_strided_slice %1 {offsets = [1, 0], sizes = [1, 32], strides = [1, 1]} : vector<2x32xf32> to vector<1x32xf32>
    %11 = vector.broadcast %10 : vector<1x32xf32> to vector<8x32xf32>
    %12 = arith.mulf %0, %11 : vector<8x32xf32>
    %cst_4 = arith.constant dense<0.000000e+00> : vector<8xf32>
    %13 = vector.multi_reduction <add>, %12, %cst_4 [1] : vector<8x32xf32> to vector<8xf32>
    %14 = vector.shape_cast %13 : vector<8xf32> to vector<8x1xf32>
    %c1 = arith.constant 1 : index
    %15 = memref.load %arg3[%c1] : memref<2xf32, #tpu.memory_space<smem>>
    %16 = vector.broadcast %15 : f32 to vector<8x1xf32>
    %17 = arith.addf %14, %16 : vector<8x1xf32>
    %18 = tpu.concatenate %9, %17 in 1 : vector<8x1xf32>, vector<8x1xf32> -> vector<8x2xf32>
    %c0_5 = arith.constant 0 : index
    %c0_6 = arith.constant 0 : index
    %19 = vector.load %arg4[%c0_5, %c0_6] : memref<8x2xf32, #tpu.memory_space<vmem>>, vector<8x2xf32>
    tpu.vector_store %arg4[%c0_5, %c0_6], %18 {strides = array<i32>} : memref<8x2xf32, #tpu.memory_space<vmem>>, vector<8x2xf32>,
    return
  }
  func.func @transform_0(%arg0: i32) -> (i32, i32) {
    %c0_i32 = arith.constant 0 : i32
    %c0_i32_0 = arith.constant 0 : i32
    return %arg0, %c0_i32 : i32, i32
  }
  func.func @transform_1(%arg0: i32) -> (i32, i32) {
    %c0_i32 = arith.constant 0 : i32
    %c0_i32_0 = arith.constant 0 : i32
    %c0_i32_1 = arith.constant 0 : i32
    return %c0_i32, %c0_i32_0 : i32, i32
  }
  func.func @transform_2(%arg0: i32) -> i32 {
    %c0_i32 = arith.constant 0 : i32
    %c0_i32_0 = arith.constant 0 : i32
    return %c0_i32 : i32
  }
  func.func @transform_3(%arg0: i32) -> (i32, i32) {
    %c0_i32 = arith.constant 0 : i32
    %c0_i32_0 = arith.constant 0 : i32
    return %arg0, %c0_i32 : i32, i32
  }
}

</mosaic_0001>

<llo_original>
// kernel: tpu_custom_call.1
$region0: #{tpu_custom_call.1}
  #allocation0 [shape = 'u32[]', space=smem, size = 0x4, offset = 0x4, fixed_abs, tag = 'smem constant byte address 0x4 - core index']
  #allocation1 [shape = 'u32[144,128]{1,0:T(1,128)}', space=vmem, size = 0x12000, scoped, tag = 'internal scratch']
  %s0 = inlined_call_operand.hbm [shape: f32[8,32], index: 0, kind: input, shape index: {}]
  %s1 = inlined_call_operand.vmem [shape: f32[2,32], index: 1, kind: input, shape index: {}]
  %s2 = inlined_call_operand.vmem [shape: f32[2], index: 2, kind: input, shape index: {}]
  %s3 = inlined_call_operand.vmem [shape: f32[8,2], index: 3, kind: output, shape index: {}]
  %s4 = sld [smem:[#allocation0]]
  $region30: #{tpu_custom_call.1} parent=0
    _
  %s6 = ssub.s32 1, %s4
  %s7 = scalar_select 0, %s6, %s4
  $region1: #{tpu_custom_call.1} parent=0
    #allocation2 [shape = 'u8[4096]{0}', space=vmem, size = 0x1000, scoped, tag = 'input window, operand 0, single buffered']
    #allocation3 [shape = 's32[1]{0}', space=sflag, size = 0x4, scoped, tag = 'scoped memory for tpu_custom_call.1']
    #allocation4 [shape = 's32[1]{0}', space=sflag, size = 0x4, scoped, tag = 'scoped memory for tpu_custom_call.1']
    #allocation5 [shape = 'u8[512]{0}', space=smem, size = 0x200, scoped, tag = 'input window, operand 2, single buffered']
    %8 = vsyncpa [#allocation3], 0
    %9 = vsyncpa [#allocation4], 0
    // Predicated region
    $region2: #{tpu_custom_call.1} parent=1 // pred_check
      _
    $region3: #{tpu_custom_call.1} parent=1 // pred_check_branch
      %11 = sbr.rel (0) target = $region5
    $region4: #{tpu_custom_call.1} parent=1 // pred_region
      %s13 = ssub.s32 128, 128
      %14 = vsyncadd [#allocation3], %s13
      %s16 = sshll.u32 [#allocation2], 4
      %s17 = int_to_ptr.vmem [resolvable:$true] %s16
      %19 = dma.hbm_to_vmem [thread:$0]  %s0, 128, %s17, [#allocation3]
    $region5: #{tpu_custom_call.1} parent=1 // pred_fallthru
      _
    // Predicated region
    $region6: #{tpu_custom_call.1} parent=1 // pred_check
      _
    $region7: #{tpu_custom_call.1} parent=1 // pred_check_branch
      %21 = sbr.rel (0) target = $region9
    $region8: #{tpu_custom_call.1} parent=1 // pred_region
      _
    $region9: #{tpu_custom_call.1} parent=1 // pred_fallthru
      _
    // Predicated region
    $region10: #{tpu_custom_call.1} parent=1 // pred_check
      _
    $region11: #{tpu_custom_call.1} parent=1 // pred_check_branch
      %23 = sbr.rel (0) target = $region13
    $region12: #{tpu_custom_call.1} parent=1 // pred_region
      %s25 = ssub.s32 16, 16
      %26 = vsyncadd [#allocation4], %s25
      %s28 = sshll.u32 %s2, 4
      %s29 = int_to_ptr.vmem [resolvable:$true] %s28
      %31 = dma.vmem_to_smem %s29, 16, [#allocation5], [#allocation4]
    $region13: #{tpu_custom_call.1} parent=1 // pred_fallthru
      _
    // Predicated region
    $region14: #{tpu_custom_call.1} parent=1 // pred_check
      _
    $region15: #{tpu_custom_call.1} parent=1 // pred_check_branch
      %33 = sbr.rel (0) target = $region17
    $region16: #{tpu_custom_call.1} parent=1 // pred_region
      %34 = dma.done [#allocation3], 128
    $region17: #{tpu_custom_call.1} parent=1 // pred_fallthru
      _
    // Predicated region
    $region18: #{tpu_custom_call.1} parent=1 // pred_check
      _
    $region19: #{tpu_custom_call.1} parent=1 // pred_check_branch
      %36 = sbr.rel (0) target = $region21
    $region20: #{tpu_custom_call.1} parent=1 // pred_region
      %37 = dma.done [#allocation4], 16
    $region21: #{tpu_custom_call.1} parent=1 // pred_fallthru
      _
    %38 = sfence
    %v39 = vld [vmem:[#allocation2] sm:$0xff]
    %v40 = vld [vmem:[%s1] sm:$0x3]
    %v41 = vlaneseq
    %v42 = vshrl.u32 %v41, 7
    %v43 = vsub.s32 0, %v42
    %v44 = vrot.slane %v40, %v43
    %v45 = vmul.f32 %v39, %v44
    %vm46 = vcmask 261120
    %v47 = vsel %vm46, %v45, 0.0
    %48 = vadd.xlane.f32.xlu0 %v47
    %v49 = vpop.xlane.xlu0 %48
    %s50 = sld [smem:[#allocation5]]
    %v51 = vstv %s50
    %v52 = vadd.f32 %v49, %v51
    %v53 = vlaneseq
    %v54 = vshrl.u32 %v53, 7
    %v55 = vsub.s32 1, %v54
    %v56 = vrot.slane %v40, %v55
    %v57 = vmul.f32 %v39, %v56
    %v58 = vsel %vm46, %v57, 0.0
    %59 = vadd.xlane.f32.xlu0 %v58
    %v60 = vpop.xlane.xlu0 %59
    %s61 = sld [smem:[#allocation5 + $0x1]]
    %v62 = vstv %s61
    %v63 = vadd.f32 %v60, %v62
    %vm64 = vcmask 7168
    %v65 = vsel %vm64, %v52, %v63
    %vm66 = vcmask 15360
    %67 = vst.msk [vmem:[%s3] sm:$0xff] %vm66, %v65
    // Predicated region
    $region22: #{tpu_custom_call.1} parent=1 // pred_check
      _
    $region23: #{tpu_custom_call.1} parent=1 // pred_check_branch
      %69 = sbr.rel (0) target = $region25
    $region24: #{tpu_custom_call.1} parent=1 // pred_region
      _
    $region25: #{tpu_custom_call.1} parent=1 // pred_fallthru
      _
    // Predicated region
    $region26: #{tpu_custom_call.1} parent=1 // pred_check
      _
    $region27: #{tpu_custom_call.1} parent=1 // pred_check_branch
      %71 = sbr.rel (0) target = $region29
    $region28: #{tpu_custom_call.1} parent=1 // pred_region
      _
    $region29: #{tpu_custom_call.1} parent=1 // pred_fallthru
      _
    %72 = vsyncpa [#allocation3], 1
    %73 = vsyncpa [#allocation4], 1

</llo_original>
